<compile_context>
chip_gen: v7x
topology: tpu7x:2x2x1
jax: 0.10.0
libtpu: 0.0.40
codegen_flags: <defaults>
</compile_context>

<pallas_src>
import math
import functools
from typing import NamedTuple

import jax
import jax.numpy as jnp
from jax.experimental import pallas as pl
from jax.experimental.pallas import tpu as pltpu


# --------------------------------------------------------------------------- #
# helpers
# --------------------------------------------------------------------------- #
def _round_up(x, m):
    return (x + m - 1) // m * m


def _cdiv(a, b):
    return (a + b - 1) // b


def _gelu(x, approximate):
    if approximate:
        # tanh-approx GELU (EUP path; essentially free while the MXU is busy).
        return jax.nn.gelu(x, approximate=True)
    # PyTorch nn.GELU() default: 0.5*x*(1+erf(x/sqrt(2)))
    return 0.5 * x * (1.0 + jax.lax.erf(x * (1.0 / math.sqrt(2.0))))


def _row_multiple(itemsize):
    # Sub-32-bit dtypes pack rows along sublanes: 2 rows/sublane for 16-bit,
    # 4 for 8-bit.  Keep the row tile a multiple of the packing factor * 8.
    return {4: 8, 2: 16, 1: 32}.get(int(itemsize), 8)


def _vmem_budget_bytes():
    """Generation-aware scoped-VMEM budget (~85% of physical VMEM).

    v5e/v6e: 128 MiB physical -> ~108 MiB budget; v7x: 64 MiB -> ~54 MiB.
    Falls back to a conservative 64 MiB * 0.85 if the query is unavailable.
    """
    cap = 64 * 1024 * 1024
    try:
        cap = int(pltpu.get_tpu_info().vmem_capacity_bytes)
    except Exception:
        pass
    return int(cap * 0.85)


def _vmem_estimate(tm, tk, din, dmid_p, dout_p, comp_isz, out_isz,
                   weight_buffers):
    """Rough tile working-set size (bytes) for the pipelined kernel."""
    return (2 * tm * din * comp_isz                      # x tile (2 buffers)
            + weight_buffers * din * tk * comp_isz       # w1 tile
            + 2 * dmid_p * 4                             # b1 (resident, f32)
            + weight_buffers * tk * dout_p * comp_isz    # w2 tile
            + 2 * dout_p * 4                             # b2
            + 2 * tm * dout_p * out_isz                  # out tile (2 buffers)
            + tm * dout_p * 4)                           # f32 accumulator (worst case)


# --------------------------------------------------------------------------- #
# static tiling plan + one-time weight preparation (kept OUT of the per-call jit)
# --------------------------------------------------------------------------- #
class MLPTiles(NamedTuple):
    din: int
    dmid: int
    dout: int
    dmid_p: int
    dout_p: int
    tm: int
    tk: int


class MLPParams(NamedTuple):
    w1: jax.Array   # (din, dmid_p), compute dtype
    b1: jax.Array   # (1, dmid_p),  float32, fully resident in VMEM
    w2: jax.Array   # (dmid_p, dout_p), compute dtype
    b2: jax.Array   # (1, dout_p),  float32


def plan_mlp_tiles(din, dmid, dout, *, tm=256, tk=512,
                   compute_dtype=jnp.bfloat16, weight_buffers=2):
    comp_isz = jnp.dtype(compute_dtype).itemsize
    row_mult = _row_multiple(comp_isz)
    tm = _round_up(max(tm, row_mult), row_mult)
    tk = max(128, _round_up(tk, 128))
    tk = min(tk, _round_up(dmid, 128))
    dout_p = _round_up(dout, 128)                 # lane-dense output
    budget = _vmem_budget_bytes()

    def est(tm_, tk_):
        dmid_p_ = _round_up(dmid, tk_)
        return _vmem_estimate(tm_, tk_, din, dmid_p_, dout_p,
                              comp_isz, 4, weight_buffers)

    # Shrink tk (then tm) until the tile working set fits the scoped-VMEM
    # budget, instead of just clamping vmem_limit_bytes (robust on v7x's 64 MiB).
    while est(tm, tk) > budget and tk > 128:
        tk = max(128, _round_up(tk // 2, 128))
    while est(tm, tk) > budget and tm > row_mult:
        tm = max(row_mult, _round_up(tm // 2, row_mult))
    # TODO(synk): if it still does not fit (huge din AND dout in one block), add
    #             a dout (N) grid axis; not needed for typical MLP head sizes.

    dmid_p = _round_up(dmid, tk)
    return MLPTiles(din, dmid, dout, dmid_p, dout_p, tm, tk)


def prepare_mlp(w1, b1, w2, b2, *, tm=256, tk=512,
                compute_dtype=jnp.bfloat16, weight_buffers=2):
    """One-time pad + cast of the weights.  Call once, reuse across calls."""
    din, dmid = w1.shape
    dout = w2.shape[1]
    tiles = plan_mlp_tiles(din, dmid, dout, tm=tm, tk=tk,
                           compute_dtype=compute_dtype,
                           weight_buffers=weight_buffers)
    w1p = jnp.pad(w1.astype(compute_dtype),
                  ((0, 0), (0, tiles.dmid_p - dmid)))
    b1p = jnp.pad(b1.astype(jnp.float32).reshape(1, dmid),
                  ((0, 0), (0, tiles.dmid_p - dmid)))
    w2p = jnp.pad(w2.astype(compute_dtype),
                  ((0, tiles.dmid_p - dmid), (0, tiles.dout_p - dout)))
    b2p = jnp.pad(b2.astype(jnp.float32).reshape(1, dout),
                  ((0, 0), (0, tiles.dout_p - dout)))
    return MLPParams(w1p, b1p, w2p, b2p), tiles


# --------------------------------------------------------------------------- #
# kernel
# --------------------------------------------------------------------------- #
def mlp_kernel(x_ref, w1_ref, b1_ref, w2_ref, b2_ref, o_ref, *scratch,
               tk, approximate_gelu, acc_in_out):
    # Grid: (row tiles [parallel], hidden-dim reduction tiles [arbitrary]).
    # x_ref:  (tm, Din)       w1_ref: (Din, tk)     b1_ref: (1, Dmid_p) resident
    # w2_ref: (tk, Dout_p)    b2_ref: (1, Dout_p)   o_ref:  (tm, Dout_p)
    # scratch: () if acc_in_out (f32 output doubles as accumulator),
    #          else one (tm, Dout_p) f32 accumulator.
    k = pl.program_id(1)
    acc_ref = o_ref if acc_in_out else scratch[0]

    @pl.when(k == 0)
    def _():
        acc_ref[...] = jnp.zeros_like(acc_ref)

    # First matmul on a (tm, tk) hidden slab, f32 accumulate on the MXU.
    h = jnp.dot(x_ref[...], w1_ref[...], preferred_element_type=jnp.float32)
    b1 = b1_ref[:, pl.ds(pl.multiple_of(k * tk, 128), tk)]   # (1, tk) slice
    h = _gelu(h + b1.astype(jnp.float32), approximate_gelu)

    # Second matmul accumulated over the hidden dimension.
    acc_ref[...] += jnp.dot(h.astype(w2_ref.dtype), w2_ref[...],
                            preferred_element_type=jnp.float32)

    @pl.when(k == pl.num_programs(1) - 1)
    def _():
        if acc_in_out:
            o_ref[...] += b2_ref[...]
        else:
            o_ref[...] = (acc_ref[...] + b2_ref[...]).astype(o_ref.dtype)


# --------------------------------------------------------------------------- #
# per-call wrapper (only pads activation rows; weights already prepared)
# --------------------------------------------------------------------------- #
@functools.partial(jax.jit,
                   static_argnames=("tiles", "approximate_gelu",
                                    "weight_buffers"))
def mlp_pallas(x, params: MLPParams, tiles: MLPTiles, *,
               approximate_gelu=True, weight_buffers=2):
    """x: [..., in_size] -> [..., out_size]."""
    lead = x.shape[:-1]
    din, dout = tiles.din, tiles.dout
    assert x.shape[-1] == din
    out_dtype = x.dtype
    acc_in_out = jnp.dtype(out_dtype) == jnp.dtype(jnp.float32)

    comp_dtype = params.w1.dtype
    comp_isz = jnp.dtype(comp_dtype).itemsize
    out_isz = jnp.dtype(out_dtype).itemsize
    row_mult = _row_multiple(comp_isz)

    x2d = x.reshape(-1, din).astype(comp_dtype)
    M = x2d.shape[0]

    # Row tile: clamp to problem size; ensure >= 2 tiles when M allows so the
    # "parallel" axis can be split across v7x's two TensorCores.
    tm_eff = min(tiles.tm, _round_up(M, row_mult))
    if M > row_mult and _cdiv(M, tm_eff) < 2:
        tm_eff = max(row_mult, _round_up(_cdiv(M, 2), row_mult))
    m_p = _round_up(M, tm_eff)
    x2d = jnp.pad(x2d, ((0, m_p - M), (0, 0)))

    tk = tiles.tk
    dmid_p, dout_p = tiles.dmid_p, tiles.dout_p
    grid = (m_p // tm_eff, dmid_p // tk)

    # VMEM budget: estimate working set, add headroom, cap at ~85% of physical.
    vmem_bytes = _vmem_estimate(tm_eff, tk, din, dmid_p, dout_p,
                                comp_isz, out_isz, max(2, weight_buffers))
    vmem_limit = int(min(max(vmem_bytes * 5 // 4, 32 * 1024 * 1024),
                         _vmem_budget_bytes()))

    cost = pl.CostEstimate(
        flops=2 * m_p * (din * dmid_p + dmid_p * dout_p),
        transcendentals=m_p * dmid_p,
        bytes_accessed=(m_p * din * comp_isz
                        + params.w1.size * comp_isz + params.w2.size * comp_isz
                        + (params.b1.size + params.b2.size) * 4
                        + m_p * dout_p * out_isz))

    def wspec(shape, index_map):
        # Optional deeper weight-tile buffering for small-M, latency-bound shapes.
        if weight_buffers > 2:
            return pl.BlockSpec(shape, index_map,
                                pipeline_mode=pl.Buffered(weight_buffers))
        return pl.BlockSpec(shape, index_map)

    scratch_shapes = [] if acc_in_out else [pltpu.VMEM((tm_eff, dout_p),
                                                       jnp.float32)]

    out2d = pl.pallas_call(
        functools.partial(mlp_kernel, tk=tk,
                          approximate_gelu=approximate_gelu,
                          acc_in_out=acc_in_out),
        out_shape=jax.ShapeDtypeStruct((m_p, dout_p), out_dtype),
        grid_spec=pltpu.PrefetchScalarGridSpec(
            num_scalar_prefetch=0,
            grid=grid,
            in_specs=[
                pl.BlockSpec((tm_eff, din), lambda i, k: (i, 0)),   # x rows
                wspec((din, tk), lambda i, k: (0, k)),              # w1 slice
                pl.BlockSpec((1, dmid_p), lambda i, k: (0, 0)),     # b1 resident
                wspec((tk, dout_p), lambda i, k: (k, 0)),           # w2 slice
                pl.BlockSpec((1, dout_p), lambda i, k: (0, 0)),     # b2 resident
            ],
            out_specs=pl.BlockSpec((tm_eff, dout_p), lambda i, k: (i, 0)),
            scratch_shapes=scratch_shapes,
        ),
        compiler_params=pltpu.CompilerParams(
            dimension_semantics=("parallel", "arbitrary"),
            vmem_limit_bytes=vmem_limit),
        cost_estimate=cost,
    )(x2d, params.w1, params.b1, params.w2, params.b2)

    return out2d[:M, :dout].reshape(*lead, dout)


# --------------------------------------------------------------------------- #
# reference + init
# --------------------------------------------------------------------------- #
def mlp_reference(x, w1, b1, w2, b2, approximate_gelu=False):
    h = jnp.einsum("...i,ij->...j", x, w1) + b1
    h = _gelu(h, approximate_gelu)
    return jnp.einsum("...i,ij->...j", h, w2) + b2


def init_params(key, in_size, mid_size, out_size, dtype=jnp.float32):
    # Deterministic init mimicking nn.Linear default (uniform +/- 1/sqrt(fan_in)).
    k1, k2, k3, k4 = jax.random.split(key, 4)
    b1_bound = 1.0 / math.sqrt(in_size)
    b2_bound = 1.0 / math.sqrt(mid_size)
    # stored as [in_features, out_features] == W.T of PyTorch nn.Linear.weight
    w1 = jax.random.uniform(k1, (in_size, mid_size), dtype, -b1_bound, b1_bound)
    b1 = jax.random.uniform(k2, (mid_size,), dtype, -b1_bound, b1_bound)
    w2 = jax.random.uniform(k3, (mid_size, out_size), dtype, -b2_bound, b2_bound)
    b2 = jax.random.uniform(k4, (out_size,), dtype, -b2_bound, b2_bound)
    return w1, b1, w2, b2


if __name__ == "__main__":
    key = jax.random.PRNGKey(0)
    kx, kp, ky = jax.random.split(key, 3)

    batch, seq = 2, 8
    in_size, mid_size, out_size = 32, 64, 16

    x = jax.random.normal(kx, (batch, seq, in_size), dtype=jnp.float32)
    w1, b1, w2, b2 = init_params(kp, in_size, mid_size, out_size)

    # Weights are prepared (padded + cast) exactly once, outside the call path.
    params_bf16, tiles_bf16 = prepare_mlp(w1, b1, w2, b2)  # bf16 default
    params_f32, tiles_f32 = prepare_mlp(w1, b1, w2, b2,
                                        compute_dtype=jnp.float32)

    # 1) Default perf path: bf16 MXU inputs, f32 accumulate, tanh GELU.
    out = jax.block_until_ready(mlp_pallas(x, params_bf16, tiles_bf16))
    ref_tanh = mlp_reference(x, w1, b1, w2, b2, approximate_gelu=True)
    assert out.shape == (batch, seq, out_size)
    assert jnp.allclose(out, ref_tanh, atol=5e-2, rtol=5e-2), "bf16 mismatch"

    # 2) Exact parity path: f32 compute + exact-erf GELU (PyTorch nn.GELU()).
    out_exact = jax.block_until_ready(
        mlp_pallas(x, params_f32, tiles_f32, approximate_gelu=False))
    ref_erf = mlp_reference(x, w1, b1, w2, b2, approximate_gelu=False)
    assert jnp.allclose(out_exact, ref_erf, atol=1e-5, rtol=1e-5), "f32 mismatch"

    # 3) Non-divisible row count exercises row padding + the >=2-row-tile path.
    x_odd = jax.random.normal(ky, (3, 5, in_size), dtype=jnp.float32)
    out_odd = jax.block_until_ready(
        mlp_pallas(x_odd, params_f32, tiles_f32, approximate_gelu=False))
    ref_odd = mlp_reference(x_odd, w1, b1, w2, b2, approximate_gelu=False)
    assert out_odd.shape == (3, 5, out_size)
    assert jnp.allclose(out_odd, ref_odd, atol=1e-5, rtol=1e-5), "padded-M mismatch"

    # 4) bf16 output dtype exercises the separate f32 accumulator scratch path.
    out_b = jax.block_until_ready(
        mlp_pallas(x.astype(jnp.bfloat16), params_bf16, tiles_bf16))
    assert out_b.dtype == jnp.bfloat16
    assert jnp.allclose(out_b.astype(jnp.float32), ref_tanh,
                        atol=1e-1, rtol=1e-1), "bf16-out mismatch"

    print("KERNEL_OK")
</pallas_src>

<mosaic_0001>
module attributes {stable_mosaic.version = 11 : i64} {
  func.func @mlp_kernel(%arg0: i32, %arg1: i32, %arg2: memref<16x32xbf16, #tpu.memory_space<vmem>>, %arg3: memref<32x128xbf16, #tpu.memory_space<vmem>>, %arg4: memref<1x128xf32, #tpu.memory_space<vmem>>, %arg5: memref<128x128xbf16, #tpu.memory_space<vmem>>, %arg6: memref<1x128xf32, #tpu.memory_space<vmem>>, %arg7: memref<16x128xf32, #tpu.memory_space<vmem>>) attributes {dimension_semantics = [#tpu.dimension_semantics<parallel>, #tpu.dimension_semantics<arbitrary>], iteration_bounds = array<i64: 1, 1>, scalar_prefetch = 0 : i64, scratch_operands = 0 : i64, tpu.core_type = #tpu.core_type<tc>, window_params = [{transform_indices = @transform_0, window_bounds = array<i64: 16, 32>}, {transform_indices = @transform_1, window_bounds = array<i64: 32, 128>}, {pipeline_mode = #tpu.pipeline_mode<synchronous>, transform_indices = @transform_2, window_bounds = array<i64: 1, 128>}, {transform_indices = @transform_3, window_bounds = array<i64: 128, 128>}, {pipeline_mode = #tpu.pipeline_mode<synchronous>, transform_indices = @transform_4, window_bounds = array<i64: 1, 128>}, {transform_indices = @transform_5, window_bounds = array<i64: 16, 128>}]} {
    %c0_i32 = arith.constant 0 : i32
    %0 = arith.cmpi eq, %arg1, %c0_i32 : i32
    %1 = arith.extui %0 : i1 to i32
    %c0_i32_0 = arith.constant 0 : i32
    %2 = arith.cmpi ne, %1, %c0_i32_0 : i32
    scf.if %2 {
      %cst_18 = arith.constant 0.000000e+00 : f32
      %34 = vector.broadcast %cst_18 : f32 to vector<16x128xf32>
      %c0_19 = arith.constant 0 : index
      %c0_20 = arith.constant 0 : index
      %35 = vector.load %arg7[%c0_19, %c0_20] : memref<16x128xf32, #tpu.memory_space<vmem>>, vector<16x128xf32>
      tpu.vector_store %arg7[%c0_19, %c0_20], %34 {strides = array<i32>} : memref<16x128xf32, #tpu.memory_space<vmem>>, vector<16x128xf32>,
    } else {
    }
    %c0 = arith.constant 0 : index
    %c0_1 = arith.constant 0 : index
    %3 = vector.load %arg2[%c0, %c0_1] : memref<16x32xbf16, #tpu.memory_space<vmem>>, vector<16x32xbf16>
    %c0_2 = arith.constant 0 : index
    %c0_3 = arith.constant 0 : index
    %4 = vector.load %arg3[%c0_2, %c0_3] : memref<32x128xbf16, #tpu.memory_space<vmem>>, vector<32x128xbf16>
    %cst = arith.constant dense<0.000000e+00> : vector<16x128xf32>
    %5 = tpu.matmul %3, %4, %cst {dimension_numbers = #tpu.dot_dimension_numbers<[1], [0], [0], [1], [0, 0, 1, 1], [], []>} : vector<16x32xbf16>, vector<32x128xbf16>, vector<16x128xf32> -> vector<16x128xf32>
    %c128_i32 = arith.constant 128 : i32
    %6 = arith.muli %arg1, %c128_i32 : i32
    %7 = tpu.assume_multiple %6, 128 : i32
    %c0_4 = arith.constant 0 : index
    %8 = arith.index_cast %7 : i32 to index
    %9 = vector.load %arg4[%c0_4, %8] : memref<1x128xf32, #tpu.memory_space<vmem>>, vector<1x128xf32>
    %10 = vector.broadcast %9 : vector<1x128xf32> to vector<16x128xf32>
    %11 = arith.addf %5, %10 : vector<16x128xf32>
    %12 = arith.mulf %11, %11 : vector<16x128xf32>
    %13 = arith.mulf %11, %12 : vector<16x128xf32>
    %cst_5 = arith.constant 4.471500e-02 : f32
    %14 = vector.broadcast %cst_5 : f32 to vector<16x128xf32>
    %15 = arith.mulf %14, %13 : vector<16x128xf32>
    %16 = arith.addf %11, %15 : vector<16x128xf32>
    %cst_6 = arith.constant 0.797884583 : f32
    %17 = vector.broadcast %cst_6 : f32 to vector<16x128xf32>
    %18 = arith.mulf %17, %16 : vector<16x128xf32>
    %19 = math.tanh %18 : vector<16x128xf32>
    %cst_7 = arith.constant 1.000000e+00 : f32
    %20 = vector.broadcast %cst_7 : f32 to vector<16x128xf32>
    %21 = arith.addf %20, %19 : vector<16x128xf32>
    %cst_8 = arith.constant 5.000000e-01 : f32
    %22 = vector.broadcast %cst_8 : f32 to vector<16x128xf32>
    %23 = arith.mulf %22, %21 : vector<16x128xf32>
    %24 = arith.mulf %11, %23 : vector<16x128xf32>
    %c0_9 = arith.constant 0 : index
    %c0_10 = arith.constant 0 : index
    %25 = vector.load %arg7[%c0_9, %c0_10] : memref<16x128xf32, #tpu.memory_space<vmem>>, vector<16x128xf32>
    %26 = arith.truncf %24 : vector<16x128xf32> to vector<16x128xbf16>
    %c0_11 = arith.constant 0 : index
    %c0_12 = arith.constant 0 : index
    %27 = vector.load %arg5[%c0_11, %c0_12] : memref<128x128xbf16, #tpu.memory_space<vmem>>, vector<128x128xbf16>
    %cst_13 = arith.constant dense<0.000000e+00> : vector<16x128xf32>
    %28 = tpu.matmul %26, %27, %cst_13 {dimension_numbers = #tpu.dot_dimension_numbers<[1], [0], [0], [1], [0, 0, 1, 1], [], []>} : vector<16x128xbf16>, vector<128x128xbf16>, vector<16x128xf32> -> vector<16x128xf32>
    %29 = arith.addf %25, %28 : vector<16x128xf32>
    %c0_14 = arith.constant 0 : index
    %c0_15 = arith.constant 0 : index
    %30 = vector.load %arg7[%c0_14, %c0_15] : memref<16x128xf32, #tpu.memory_space<vmem>>, vector<16x128xf32>
    tpu.vector_store %arg7[%c0_14, %c0_15], %29 {strides = array<i32>} : memref<16x128xf32, #tpu.memory_space<vmem>>, vector<16x128xf32>,
    %c0_i32_16 = arith.constant 0 : i32
    %31 = arith.cmpi eq, %arg1, %c0_i32_16 : i32
    %32 = arith.extui %31 : i1 to i32
    %c0_i32_17 = arith.constant 0 : i32
    %33 = arith.cmpi ne, %32, %c0_i32_17 : i32
    scf.if %33 {
      %c0_18 = arith.constant 0 : index
      %c0_19 = arith.constant 0 : index
      %34 = vector.load %arg7[%c0_18, %c0_19] : memref<16x128xf32, #tpu.memory_space<vmem>>, vector<16x128xf32>
      %c0_20 = arith.constant 0 : index
      %c0_21 = arith.constant 0 : index
      %35 = vector.load %arg6[%c0_20, %c0_21] : memref<1x128xf32, #tpu.memory_space<vmem>>, vector<1x128xf32>
      %36 = vector.broadcast %35 : vector<1x128xf32> to vector<16x128xf32>
      %37 = arith.addf %34, %36 : vector<16x128xf32>
      %c0_22 = arith.constant 0 : index
      %c0_23 = arith.constant 0 : index
      %38 = vector.load %arg7[%c0_22, %c0_23] : memref<16x128xf32, #tpu.memory_space<vmem>>, vector<16x128xf32>
      tpu.vector_store %arg7[%c0_22, %c0_23], %37 {strides = array<i32>} : memref<16x128xf32, #tpu.memory_space<vmem>>, vector<16x128xf32>,
    } else {
    }
    return
  }
  func.func @transform_0(%arg0: i32, %arg1: i32) -> (i32, i32) {
    %c0_i32 = arith.constant 0 : i32
    %c0_i32_0 = arith.constant 0 : i32
    return %arg0, %c0_i32 : i32, i32
  }
  func.func @transform_1(%arg0: i32, %arg1: i32) -> (i32, i32) {
    %c0_i32 = arith.constant 0 : i32
    %c0_i32_0 = arith.constant 0 : i32
    return %c0_i32, %arg1 : i32, i32
  }
  func.func @transform_2(%arg0: i32, %arg1: i32) -> (i32, i32) {
    %c0_i32 = arith.constant 0 : i32
    %c0_i32_0 = arith.constant 0 : i32
    %c0_i32_1 = arith.constant 0 : i32
    return %c0_i32, %c0_i32_0 : i32, i32
  }
  func.func @transform_3(%arg0: i32, %arg1: i32) -> (i32, i32) {
    %c0_i32 = arith.constant 0 : i32
    %c0_i32_0 = arith.constant 0 : i32
    return %arg1, %c0_i32 : i32, i32
  }
  func.func @transform_4(%arg0: i32, %arg1: i32) -> (i32, i32) {
    %c0_i32 = arith.constant 0 : i32
    %c0_i32_0 = arith.constant 0 : i32
    %c0_i32_1 = arith.constant 0 : i32
    return %c0_i32, %c0_i32_0 : i32, i32
  }
  func.func @transform_5(%arg0: i32, %arg1: i32) -> (i32, i32) {
    %c0_i32 = arith.constant 0 : i32
    %c0_i32_0 = arith.constant 0 : i32
    return %arg0, %c0_i32 : i32, i32
  }
}

</mosaic_0001>

<llo_original>
// kernel: mlp_pallas.1
$region0: #{mlp_pallas.1}
  #allocation0 [shape = 'u32[]', space=smem, size = 0x4, offset = 0x4, fixed_abs, tag = 'smem constant byte address 0x4 - core index']
  #allocation1 [shape = 'u32[144,128]{1,0:T(1,128)}', space=vmem, size = 0x12000, scoped, tag = 'internal scratch']
  %s0 = inlined_call_operand.vmem [shape: bf16[16,32], index: 0, kind: input, shape index: {}]
  %s1 = inlined_call_operand.vmem [shape: bf16[32,128], index: 1, kind: input, shape index: {}]
  %s2 = inlined_call_operand.vmem [shape: f32[1,128], index: 2, kind: input, shape index: {}]
  %s3 = inlined_call_operand.hbm [shape: bf16[128,128], index: 3, kind: input, shape index: {}]
  %s4 = inlined_call_operand.vmem [shape: f32[1,128], index: 4, kind: input, shape index: {}]
  %s5 = inlined_call_operand.vmem [shape: f32[16,128], index: 5, kind: output, shape index: {}]
  %s6 = sld [smem:[#allocation0]]
  $region42: #{mlp_pallas.1} parent=0
    _
  %s8 = ssub.s32 1, %s6
  %s9 = scalar_select 0, %s8, %s6
  $region1: #{mlp_pallas.1} parent=0
    #allocation2 [shape = 'u8[32768]{0}', space=vmem, size = 0x8000, scoped, tag = 'input window, operand 3, single buffered']
    #allocation3 [shape = 's32[1]{0}', space=sflag, size = 0x4, scoped, tag = 'scoped memory for mlp_pallas.1']
    %10 = vsyncpa [#allocation3], 0
    // Predicated region
    $region2: #{mlp_pallas.1} parent=1 // pred_check
      _
    $region3: #{mlp_pallas.1} parent=1 // pred_check_branch
      %12 = sbr.rel (0) target = $region5
    $region4: #{mlp_pallas.1} parent=1 // pred_region
      _
    $region5: #{mlp_pallas.1} parent=1 // pred_fallthru
      _
    // Predicated region
    $region6: #{mlp_pallas.1} parent=1 // pred_check
      _
    $region7: #{mlp_pallas.1} parent=1 // pred_check_branch
      %14 = sbr.rel (0) target = $region9
    $region8: #{mlp_pallas.1} parent=1 // pred_region
      _
    $region9: #{mlp_pallas.1} parent=1 // pred_fallthru
      _
    // Predicated region
    $region10: #{mlp_pallas.1} parent=1 // pred_check
      _
    $region11: #{mlp_pallas.1} parent=1 // pred_check_branch
      %16 = sbr.rel (0) target = $region13
    $region12: #{mlp_pallas.1} parent=1 // pred_region
      _
    $region13: #{mlp_pallas.1} parent=1 // pred_fallthru
      _
    // Predicated region
    $region14: #{mlp_pallas.1} parent=1 // pred_check
      _
    $region15: #{mlp_pallas.1} parent=1 // pred_check_branch
      %18 = sbr.rel (0) target = $region17
    $region16: #{mlp_pallas.1} parent=1 // pred_region
      %s20 = ssub.s32 1024, 1024
      %21 = vsyncadd [#allocation3], %s20
      %s22 = sshll.u32 [#allocation2], 4
      %s23 = int_to_ptr.vmem [resolvable:$true] %s22
      %28 = dma.hbm_to_vmem [thread:$0]  %s3, 1024, %s23, [#allocation3], 64, 64, 4
    $region17: #{mlp_pallas.1} parent=1 // pred_fallthru
      _
    // Predicated region
    $region18: #{mlp_pallas.1} parent=1 // pred_check
      _
    $region19: #{mlp_pallas.1} parent=1 // pred_check_branch
      %30 = sbr.rel (0) target = $region21
    $region20: #{mlp_pallas.1} parent=1 // pred_region
      _
    $region21: #{mlp_pallas.1} parent=1 // pred_fallthru
      _
    // Predicated region
    $region22: #{mlp_pallas.1} parent=1 // pred_check
      _
    $region23: #{mlp_pallas.1} parent=1 // pred_check_branch
      %32 = sbr.rel (0) target = $region25
    $region24: #{mlp_pallas.1} parent=1 // pred_region
      %33 = dma.done [#allocation3], 1024
    $region25: #{mlp_pallas.1} parent=1 // pred_fallthru
      _
    %p35 = scmp.eq.s32.totalorder 0, 0
    // Predicated region
    $region26: #{mlp_pallas.1} parent=1 // pred_check
      %p36 = pneg %p35
    $region27: #{mlp_pallas.1} parent=1 // pred_check_branch
      %38 = sbr.rel (%p36) target = $region29
    $region28: #{mlp_pallas.1} parent=1 // pred_region
      %39 = vst [vmem:[%s5] sm:$0xff] 0.0
      %40 = vst [vmem:[%s5 + $0x8] sm:$0xff] 0.0
    $region29: #{mlp_pallas.1} parent=1 // pred_fallthru
      _
    %v41 = vld [vmem:[%s0] sm:$0xf]
    %v42 = vld [vmem:[%s0 + $0x4] sm:$0xf]
    %v43 = vld [vmem:[%s1] sm:$0xf]
    %v44 = vld [vmem:[%s1 + $0x4] sm:$0xf]
    %v45 = vld [vmem:[%s1 + $0x8] sm:$0xf]
    %v46 = vld [vmem:[%s1 + $0xc] sm:$0xf]
    %s47 = smul.u32 0, 128
    %s48 = sshra.s32 %s47, 7
    %s49 = sand.u32 %s47, 127
    %s50 = scalar_lea.vmem %s2, %s48
    %v51 = vld [vmem:[%s50] sm:$0x1]
    %v53 = vlaneseq
    %v54 = vshrl.u32 %v53, 7
    %v55 = vsub.s32 0, %v54
    %v56 = vrot.slane %v51, %v55
    %v60 = vunpack.c.l.b16 %v41
    %v61 = vunpack.c.l.b16 %v42
    %v62 = vpack.c.b16 %v61, %v60
    %v67 = vunpack.c.l.b16 %v43
    %v68 = vunpack.c.l.b16 %v44
    %v69 = vunpack.c.l.b16 %v45
    %v70 = vunpack.c.l.b16 %v46
    %v71 = vpack.c.b16 %v68, %v67
    %v72 = vpack.c.b16 %v70, %v69
    %vm75 = vcmask 261120
    %v77 = vsel %vm75, %v62, 0
    %79 = vmatprep.subr.bf16.mxu0 0
    %80 = vmatpush1.bf16.msra.mxu0 %v71
    %81 = vmatprep.subr.bf16.mxu0 0
    %82 = vmatpush1.bf16.msra.mxu0 %v72
    %83 = vmatprep.subr.bf16.mxu0 0
    %84 = vmatpush1.bf16.msra.mxu0 0
    %85 = vmatprep.subr.bf16.mxu0 0
    %86 = vmatpush1.bf16.msra.mxu0 0
    %87 = vmatprep.subr.bf16.mxu0 0
    %88 = vmatpush1.bf16.msra.mxu0 0
    %89 = vmatprep.subr.bf16.mxu0 0
    %90 = vmatpush1.bf16.msra.mxu0 0
    %91 = vmatprep.subr.bf16.mxu0 0
    %92 = vmatpush1.bf16.msra.mxu0 0
    %93 = vmatprep.subr.bf16.mxu0 0
    %94 = vmatpush1.bf16.msra.mxu0 0
    %95 = vmatprep.subr.bf16.mxu0 0
    %96 = vmatpush1.bf16.msra.mxu0 0
    %97 = vmatprep.subr.bf16.mxu0 0
    %98 = vmatpush1.bf16.msra.mxu0 0
    %99 = vmatprep.subr.bf16.mxu0 0
    %100 = vmatpush1.bf16.msra.mxu0 0
    %101 = vmatprep.subr.bf16.mxu0 0
    %102 = vmatpush1.bf16.msra.mxu0 0
    %103 = vmatprep.subr.bf16.mxu0 0
    %104 = vmatpush1.bf16.msra.mxu0 0
    %105 = vmatprep.subr.bf16.mxu0 0
    %106 = vmatpush1.bf16.msra.mxu0 0
    %107 = vmatprep.subr.bf16.mxu0 0
    %108 = vmatpush1.bf16.msra.mxu0 0
    %109 = vmatprep.subr.bf16.mxu0 0
    %110 = vmatpush1.bf16.msra.mxu0 0
    %111 = vmatprep.mubr.bf16.mxu0 0
    %112 = vmatmul.mubr.bf16.gmra.mrb[0].mxu0 %v77
    %v113 = vpop.f32.mrb[0].mxu0
    %v114 = vadd.f32 %v56, %v113
    %v115 = vpop.f32.mrb[0].mxu0
    %v116 = vpop.f32.mrb[0].mxu0
    %v117 = vadd.f32 %v56, %v116
    %v118 = vpop.f32.mrb[0].mxu0
    %119 = vdwg.mxu0
    %v120 = vmul.f32 %v114, %v114
    %v121 = vmul.f32 %v117, %v117
    %v122 = vmul.f32 %v114, %v120
    %v123 = vmul.f32 %v117, %v121
    %v124 = vmul.f32 %v122, 0.044715
    %v125 = vmul.f32 %v123, 0.044715
    %v126 = vadd.f32 %v114, %v124
    %v127 = vadd.f32 %v117, %v125
    %v128 = vmul.f32 %v126, 0.7978846
    %v129 = vmul.f32 %v127, 0.7978846
    %v130 = vtanh.pop %v128
    %v131 = vtanh.pop %v129
    %v132 = vadd.f32 %v130, 1.0
    %v133 = vadd.f32 %v131, 1.0
    %v134 = vmul.f32 %v132, 0.5
    %v135 = vmul.f32 %v133, 0.5
    %v136 = vmul.f32 %v114, %v134
    %v137 = vmul.f32 %v117, %v135
    %v138 = vld [vmem:[%s5] sm:$0xff]
    %v139 = vld [vmem:[%s5 + $0x8] sm:$0xff]
    %v140 = vpack.c.bf16 %v137, %v136
    %v141 = vld [vmem:[#allocation2] sm:$0xf]
    %v142 = vld [vmem:[#allocation2 + $0x4] sm:$0xf]
    %v143 = vld [vmem:[#allocation2 + $0x8] sm:$0xf]
    %v144 = vld [vmem:[#allocation2 + $0xc] sm:$0xf]
    %v145 = vld [vmem:[#allocation2 + $0x10] sm:$0xf]
    %v146 = vld [vmem:[#allocation2 + $0x14] sm:$0xf]
    %v147 = vld [vmem:[#allocation2 + $0x18] sm:$0xf]
    %v148 = vld [vmem:[#allocation2 + $0x1c] sm:$0xf]
    %v149 = vld [vmem:[#allocation2 + $0x20] sm:$0xf]
    %v150 = vld [vmem:[#allocation2 + $0x24] sm:$0xf]
    %v151 = vld [vmem:[#allocation2 + $0x28] sm:$0xf]
    %v152 = vld [vmem:[#allocation2 + $0x2c] sm:$0xf]
    %v153 = vld [vmem:[#allocation2 + $0x30] sm:$0xf]
    %v154 = vld [vmem:[#allocation2 + $0x34] sm:$0xf]
    %v155 = vld [vmem:[#allocation2 + $0x38] sm:$0xf]
    %v156 = vld [vmem:[#allocation2 + $0x3c] sm:$0xf]
    %v173 = vunpack.c.l.b16 %v141
    %v174 = vunpack.c.l.b16 %v142
    %v175 = vunpack.c.l.b16 %v143
    %v176 = vunpack.c.l.b16 %v144
    %v177 = vunpack.c.l.b16 %v145
    %v178 = vunpack.c.l.b16 %v146
    %v179 = vunpack.c.l.b16 %v147
    %v180 = vunpack.c.l.b16 %v148
    %v181 = vunpack.c.l.b16 %v149
    %v182 = vunpack.c.l.b16 %v150
    %v183 = vunpack.c.l.b16 %v151
    %v184 = vunpack.c.l.b16 %v152
    %v185 = vunpack.c.l.b16 %v153
    %v186 = vunpack.c.l.b16 %v154
    %v187 = vunpack.c.l.b16 %v155
    %v188 = vunpack.c.l.b16 %v156
    %v189 = vpack.c.b16 %v174, %v173
    %v190 = vpack.c.b16 %v176, %v175
    %v191 = vpack.c.b16 %v178, %v177
    %v192 = vpack.c.b16 %v180, %v179
    %v193 = vpack.c.b16 %v182, %v181
    %v194 = vpack.c.b16 %v184, %v183
    %v195 = vpack.c.b16 %v186, %v185
    %v196 = vpack.c.b16 %v188, %v187
    %205 = vmatprep.subr.bf16.mxu0 0
    %206 = vmatpush1.bf16.msra.mxu0 %v189
    %207 = vmatprep.subr.bf16.mxu0 0
    %208 = vmatpush1.bf16.msra.mxu0 %v190
    %209 = vmatprep.subr.bf16.mxu0 0
    %210 = vmatpush1.bf16.msra.mxu0 %v191
    %211 = vmatprep.subr.bf16.mxu0 0
    %212 = vmatpush1.bf16.msra.mxu0 %v192
    %213 = vmatprep.subr.bf16.mxu0 0
    %214 = vmatpush1.bf16.msra.mxu0 %v193
    %215 = vmatprep.subr.bf16.mxu0 0
    %216 = vmatpush1.bf16.msra.mxu0 %v194
    %217 = vmatprep.subr.bf16.mxu0 0
    %218 = vmatpush1.bf16.msra.mxu0 %v195
    %219 = vmatprep.subr.bf16.mxu0 0
    %220 = vmatpush1.bf16.msra.mxu0 %v196
    %221 = vmatprep.subr.bf16.mxu0 0
    %222 = vmatpush1.bf16.msra.mxu0 0
    %223 = vmatprep.subr.bf16.mxu0 0
    %224 = vmatpush1.bf16.msra.mxu0 0
    %225 = vmatprep.subr.bf16.mxu0 0
    %226 = vmatpush1.bf16.msra.mxu0 0
    %227 = vmatprep.subr.bf16.mxu0 0
    %228 = vmatpush1.bf16.msra.mxu0 0
    %229 = vmatprep.subr.bf16.mxu0 0
    %230 = vmatpush1.bf16.msra.mxu0 0
    %231 = vmatprep.subr.bf16.mxu0 0
    %232 = vmatpush1.bf16.msra.mxu0 0
    %233 = vmatprep.subr.bf16.mxu0 0
    %234 = vmatpush1.bf16.msra.mxu0 0
    %235 = vmatprep.subr.bf16.mxu0 0
    %236 = vmatpush1.bf16.msra.mxu0 0
    %237 = vmatprep.mubr.bf16.mxu0 0
    %238 = vmatmul.mubr.bf16.gmra.mrb[0].mxu0 %v140
    %v239 = vpop.f32.mrb[0].mxu0
    %v240 = vadd.f32 0.0, %v239
    %v241 = vpop.f32.mrb[0].mxu0
    %v242 = vpop.f32.mrb[0].mxu0
    %v243 = vadd.f32 0.0, %v242
    %v244 = vpop.f32.mrb[0].mxu0
    %245 = vdwg.mxu0
    %v246 = vadd.f32 %v138, %v240
    %v247 = vadd.f32 %v139, %v243
    %248 = vst [vmem:[%s5] sm:$0xff] %v246
    %249 = vst [vmem:[%s5 + $0x8] sm:$0xff] %v247
    // Predicated region
    $region30: #{mlp_pallas.1} parent=1 // pred_check
      %p250 = pneg %p35
    $region31: #{mlp_pallas.1} parent=1 // pred_check_branch
      %252 = sbr.rel (%p250) target = $region33
    $region32: #{mlp_pallas.1} parent=1 // pred_region
      %v253 = vld [vmem:[%s5] sm:$0xff]
      %v254 = vld [vmem:[%s5 + $0x8] sm:$0xff]
      %v255 = vld [vmem:[%s4] sm:$0x1]
      %v257 = vlaneseq
      %v258 = vshrl.u32 %v257, 7
      %v259 = vsub.s32 0, %v258
      %v260 = vrot.slane %v255, %v259
      %v262 = vadd.f32 %v253, %v260
      %v263 = vadd.f32 %v254, %v260
      %264 = vst [vmem:[%s5] sm:$0xff] %v262
      %265 = vst [vmem:[%s5 + $0x8] sm:$0xff] %v263
    $region33: #{mlp_pallas.1} parent=1 // pred_fallthru
      _
    // Predicated region
    $region34: #{mlp_pallas.1} parent=1 // pred_check
      _
    $region35: #{mlp_pallas.1} parent=1 // pred_check_branch
      %267 = sbr.rel (0) target = $region37
    $region36: #{mlp_pallas.1} parent=1 // pred_region
      _
    $region37: #{mlp_pallas.1} parent=1 // pred_fallthru
      _
    // Predicated region
    $region38: #{mlp_pallas.1} parent=1 // pred_check
      _
    $region39: #{mlp_pallas.1} parent=1 // pred_check_branch
      %269 = sbr.rel (0) target = $region41
    $region40: #{mlp_pallas.1} parent=1 // pred_region
      _
    $region41: #{mlp_pallas.1} parent=1 // pred_fallthru
      _
    %270 = vsyncpa [#allocation3], 1

</llo_original>
